<compile_context>
chip_gen: v7x
topology: tpu7x:2x2x1
jax: 0.10.0
libtpu: 0.0.40
codegen_flags: <defaults>
</compile_context>

<pallas_src>
import math
import functools

import jax
import jax.numpy as jnp
import numpy as np
from jax import lax
from jax.experimental import pallas as pl
from jax.experimental.pallas import tpu as pltpu


def _layernorm_f32(x, gamma, beta, eps):
    x = x.astype(jnp.float32)
    mean = jnp.mean(x, axis=-1, keepdims=True)
    var = jnp.mean((x - mean) * (x - mean), axis=-1, keepdims=True)
    return (x - mean) * lax.rsqrt(var + eps) * gamma + beta


def vit_block_kernel(x_ref, gamma_ref, beta_ref, w_ref, b_ref, o_ref,
                     q_sc, kv_sc, *, n_heads, d_head, hidden_d, n_groups,
                     group_w, tq, eps):
    """One grid step = (batch element b, query tile qi).

    qi == 0   : LayerNorm(full seq) + grouped block-diagonal QKV projection
                (scale already folded into W_q / b_q) -> q_sc (S, D),
                kv_sc (S, 2D).  Hoisted out of the qi loop via scratch carry.
    every qi  : per-head attention on a (tq, S) score block; softmax
                denominator applied after the PV matmul; single full-width
                (tq, D) residual store.
    """
    D = hidden_d
    qi = pl.program_id(1)
    mm_dtype = w_ref.dtype              # bf16 on the MXU in production; f32 for the tight test

    @pl.when(qi == 0)
    def _():
        # Hoisted once per batch element: no per-tile re-LN / re-projection of
        # the full sequence.
        xn = _layernorm_f32(x_ref[...], gamma_ref[...], beta_ref[...], eps)
        for g in range(n_groups):                                  # static loop
            lo = g * group_w
            xg = xn[:, lo:lo + group_w].astype(mm_dtype)
            prj = jnp.dot(xg, w_ref[g],
                          preferred_element_type=jnp.float32) + b_ref[g]   # (S, 3*gw)
            q_sc[:, lo:lo + group_w] = prj[:, :group_w]
            kv_sc[:, lo:lo + group_w] = prj[:, group_w:2 * group_w]
            kv_sc[:, D + lo:D + lo + group_w] = prj[:, 2 * group_w:]

    q_start = pl.multiple_of(qi * tq, tq)
    x_q = x_ref[pl.ds(q_start, tq), :].astype(jnp.float32)        # residual rows (tq, D)
    q_tile = q_sc[pl.ds(q_start, tq), :]                          # (tq, D), scale pre-folded

    head_outs = []
    for h in range(n_heads):                                      # static loop
        lo = h * d_head
        q_h = q_tile[:, lo:lo + d_head].astype(mm_dtype)          # (tq, dh)
        k_h = kv_sc[:, lo:lo + d_head].astype(mm_dtype)           # (S,  dh)
        v_h = kv_sc[:, D + lo:D + lo + d_head].astype(mm_dtype)   # (S,  dh)

        # Contract the last dims of q and k directly — no in-kernel transpose.
        s = lax.dot_general(q_h, k_h, (((1,), (1,)), ((), ())),
                            preferred_element_type=jnp.float32)   # (tq, S)
        s = s - jnp.max(s, axis=-1, keepdims=True)
        p = jnp.exp(s)
        row_sum = jnp.sum(p, axis=-1, keepdims=True)              # (tq, 1)
        pv = jnp.dot(p.astype(mm_dtype), v_h,
                     preferred_element_type=jnp.float32)          # (tq, dh)
        # Normalize AFTER the PV matmul: ~S/dh fewer multiplies than scaling p,
        # and exact division keeps numerics tight (no approx reciprocal).
        head_outs.append(pv / row_sum)

    msa = jnp.concatenate(head_outs, axis=-1)                     # (tq, D)
    # Single full-width (lane-dense) residual store.
    o_ref[...] = (x_q + msa).astype(o_ref.dtype)


def _build_grouped_qkv(wq, bq, wk, bk, wv, bv, heads_per_group, scale, dtype):
    """Host-side (pure numpy) fusion of per-head (out, in) Linear weights into
    per-group pre-transposed block-diagonal [Wq | Wk | Wv] matrices sized to
    the MXU tile, with the 1/sqrt(d_head) softmax scale folded into Q."""
    wq, bq = np.asarray(wq, np.float32), np.asarray(bq, np.float32)
    wk, bk = np.asarray(wk, np.float32), np.asarray(bk, np.float32)
    wv, bv = np.asarray(wv, np.float32), np.asarray(bv, np.float32)
    H, dh, _ = wq.shape
    hpg = heads_per_group
    n_groups = H // hpg
    gw = hpg * dh
    W = np.zeros((n_groups, gw, 3 * gw), np.float32)
    Bv = np.zeros((n_groups, 1, 3 * gw), np.float32)
    for g in range(n_groups):
        for hl in range(hpg):
            h = g * hpg + hl
            r = slice(hl * dh, (hl + 1) * dh)
            W[g, r, hl * dh:(hl + 1) * dh] = wq[h].T * scale
            W[g, r, gw + hl * dh:gw + (hl + 1) * dh] = wk[h].T
            W[g, r, 2 * gw + hl * dh:2 * gw + (hl + 1) * dh] = wv[h].T
            Bv[g, 0, hl * dh:(hl + 1) * dh] = bq[h] * scale
            Bv[g, 0, gw + hl * dh:gw + (hl + 1) * dh] = bk[h]
            Bv[g, 0, 2 * gw + hl * dh:2 * gw + (hl + 1) * dh] = bv[h]
    return jnp.asarray(W, dtype), jnp.asarray(Bv, jnp.float32)


def vit_block(x, gamma, beta, wq, bq, wk, bk, wv, bv, *, n_heads, eps=1e-5,
              matmul_dtype=jnp.bfloat16, mxu_group_width=256, tq=None):
    """out = x + MSA(LayerNorm(x)) as a single Pallas kernel.

    matmul_dtype=jnp.bfloat16 is the recommended production setting (all TPU
    MXUs are bf16-native); pass jnp.float32 for bit-tight verification.
    mxu_group_width: 256 for v6e/v7x, 128 for v5e.
    """
    B, S, D = x.shape
    d_head = D // n_heads
    scale = 1.0 / math.sqrt(d_head)

    # Head-group fusion sized to the MXU tile: avoids the H× wasted MACs of a
    # full (D, D) block-diagonal matmul while keeping every matmul lane-dense.
    hpg = max(1, mxu_group_width // d_head)
    while n_heads % hpg:
        hpg -= 1
    group_w = hpg * d_head
    n_groups = n_heads // hpg

    w_qkv, b_qkv = _build_grouped_qkv(wq, bq, wk, bk, wv, bv, hpg, scale,
                                      matmul_dtype)

    gamma = jnp.asarray(gamma, jnp.float32).reshape(1, D)
    beta = jnp.asarray(beta, jnp.float32).reshape(1, D)

    # Query-tile axis: bounds the live (tq, S) score block and gives a second
    # grid dim.  (For S not a multiple of 128 — e.g. ViT's S=197 — pad/mask
    # host-side to keep the qi axis real on megacore parts; not needed here.)
    if tq is None:
        tq = 128 if S % 128 == 0 else S
    n_q_tiles = S // tq

    kernel = functools.partial(vit_block_kernel, n_heads=n_heads,
                               d_head=d_head, hidden_d=D, n_groups=n_groups,
                               group_w=group_w, tq=tq, eps=eps)

    def const(shape):
        return pl.BlockSpec(shape, lambda b, qi: (0,) * len(shape))

    return pl.pallas_call(
        kernel,
        out_shape=jax.ShapeDtypeStruct((B, S, D), x.dtype),
        grid_spec=pltpu.PrefetchScalarGridSpec(
            num_scalar_prefetch=0,
            grid=(B, n_q_tiles),
            in_specs=[
                # Single x stream: full-seq block; query rows sliced in-kernel.
                pl.BlockSpec((None, S, D), lambda b, qi: (b, 0, 0)),
                const((1, D)),                              # gamma
                const((1, D)),                              # beta
                const((n_groups, group_w, 3 * group_w)),    # grouped fused W_qkv
                const((n_groups, 1, 3 * group_w)),          # grouped fused b_qkv
            ],
            out_specs=pl.BlockSpec((None, tq, D), lambda b, qi: (b, qi, 0)),
            scratch_shapes=[
                pltpu.VMEM((S, D), jnp.float32),            # q_sc  (per-batch carry)
                pltpu.VMEM((S, 2 * D), jnp.float32),        # kv_sc (per-batch carry)
            ],
        ),
        # qi carries the per-batch QKV scratch -> must be "arbitrary" (and is
        # innermost); b stays "parallel" for megacore sharding.
        compiler_params=pltpu.CompilerParams(
            dimension_semantics=("parallel", "arbitrary")),
    )(x, gamma, beta, w_qkv, b_qkv)


def vit_block_ref(x, gamma, beta, wq, bq, wk, bk, wv, bv, *, n_heads, eps=1e-5):
    """Pure-JAX reference mirroring the PyTorch forward."""
    B, S, D = x.shape
    d_head = D // n_heads
    mean = jnp.mean(x, axis=-1, keepdims=True)
    var = jnp.mean((x - mean) ** 2, axis=-1, keepdims=True)
    xn = (x - mean) / jnp.sqrt(var + eps) * gamma[0] + beta[0]
    outs = []
    for h in range(n_heads):
        seq = xn[:, :, h * d_head:(h + 1) * d_head]
        q = jnp.einsum('bsd,ed->bse', seq, wq[h]) + bq[h]
        k = jnp.einsum('bsd,ed->bse', seq, wk[h]) + bk[h]
        v = jnp.einsum('bsd,ed->bse', seq, wv[h]) + bv[h]
        att = jax.nn.softmax(jnp.einsum('bqd,bkd->bqk', q, k) / math.sqrt(d_head), axis=-1)
        outs.append(jnp.einsum('bqk,bkd->bqd', att, v))
    return x + jnp.concatenate(outs, axis=-1)


if __name__ == "__main__":
    B, S, D, NH = 2, 8, 32, 2
    DH = D // NH

    key = jax.random.PRNGKey(0)
    ks = jax.random.split(key, 8)

    x = jax.random.normal(ks[0], (B, S, D), jnp.float32)

    # deterministic parameter init (synthetic, not a checkpoint)
    gamma = jnp.ones((1, D), jnp.float32)
    beta = jnp.zeros((1, D), jnp.float32)
    lim = 1.0 / math.sqrt(DH)
    wq = jax.random.uniform(ks[1], (NH, DH, DH), jnp.float32, -lim, lim)
    bq = jax.random.uniform(ks[2], (NH, DH), jnp.float32, -lim, lim)
    wk = jax.random.uniform(ks[3], (NH, DH, DH), jnp.float32, -lim, lim)
    bk = jax.random.uniform(ks[4], (NH, DH), jnp.float32, -lim, lim)
    wv = jax.random.uniform(ks[5], (NH, DH, DH), jnp.float32, -lim, lim)
    bv = jax.random.uniform(ks[6], (NH, DH), jnp.float32, -lim, lim)

    ref = vit_block_ref(x, gamma, beta, wq, bq, wk, bk, wv, bv, n_heads=NH)

    # Tight check with f32 MXU operands (exact softmax normalization — no
    # approximate reciprocal anymore, which caused the previous 2.5e-3 miss).
    out_f32 = jax.block_until_ready(
        vit_block(x, gamma, beta, wq, bq, wk, bk, wv, bv, n_heads=NH,
                  matmul_dtype=jnp.float32))
    np.testing.assert_allclose(np.asarray(out_f32), np.asarray(ref),
                               rtol=2e-3, atol=2e-3)

    # Production path: bf16 MXU operands, f32 accumulation (looser tolerance).
    out_bf16 = jax.block_until_ready(
        vit_block(x, gamma, beta, wq, bq, wk, bk, wv, bv, n_heads=NH,
                  matmul_dtype=jnp.bfloat16))
    np.testing.assert_allclose(np.asarray(out_bf16), np.asarray(ref),
                               rtol=5e-2, atol=5e-2)

    print("KERNEL_OK")
</pallas_src>

<mosaic_0001>
module attributes {stable_mosaic.version = 11 : i64} {
  func.func @vit_block_kernel(%arg0: i32, %arg1: i32, %arg2: memref<1x8x32xf32, #tpu.memory_space<vmem>>, %arg3: memref<1x32xf32, #tpu.memory_space<vmem>>, %arg4: memref<1x32xf32, #tpu.memory_space<vmem>>, %arg5: memref<1x32x96xf32, #tpu.memory_space<vmem>>, %arg6: memref<1x1x96xf32, #tpu.memory_space<vmem>>, %arg7: memref<1x8x32xf32, #tpu.memory_space<vmem>>, %arg8: memref<8x32xf32, #tpu.memory_space<vmem>>, %arg9: memref<8x64xf32, #tpu.memory_space<vmem>>) attributes {dimension_semantics = [#tpu.dimension_semantics<parallel>, #tpu.dimension_semantics<arbitrary>], iteration_bounds = array<i64: 2, 1>, scalar_prefetch = 0 : i64, scratch_operands = 2 : i64, tpu.core_type = #tpu.core_type<tc>, window_params = [{transform_indices = @transform_0, window_bounds = array<i64: 1, 8, 32>}, {pipeline_mode = #tpu.pipeline_mode<synchronous>, transform_indices = @transform_1, window_bounds = array<i64: 1, 32>}, {pipeline_mode = #tpu.pipeline_mode<synchronous>, transform_indices = @transform_2, window_bounds = array<i64: 1, 32>}, {pipeline_mode = #tpu.pipeline_mode<synchronous>, transform_indices = @transform_3, window_bounds = array<i64: 1, 32, 96>}, {pipeline_mode = #tpu.pipeline_mode<synchronous>, transform_indices = @transform_4, window_bounds = array<i64: 1, 1, 96>}, {transform_indices = @transform_5, window_bounds = array<i64: 1, 8, 32>}]} {
    %c0_i32 = arith.constant 0 : i32
    %0 = arith.cmpi eq, %arg1, %c0_i32 : i32
    %1 = arith.extui %0 : i1 to i32
    %c0_i32_0 = arith.constant 0 : i32
    %2 = arith.cmpi ne, %1, %c0_i32_0 : i32
    scf.if %2 {
      %c0_18 = arith.constant 0 : index
      %c0_19 = arith.constant 0 : index
      %c0_20 = arith.constant 0 : index
      %43 = vector.load %arg2[%c0_18, %c0_19, %c0_20] : memref<1x8x32xf32, #tpu.memory_space<vmem>>, vector<1x8x32xf32>
      %44 = vector.shape_cast %43 : vector<1x8x32xf32> to vector<8x32xf32>
      %c0_21 = arith.constant 0 : index
      %c0_22 = arith.constant 0 : index
      %45 = vector.load %arg3[%c0_21, %c0_22] : memref<1x32xf32, #tpu.memory_space<vmem>>, vector<1x32xf32>
      %c0_23 = arith.constant 0 : index
      %c0_24 = arith.constant 0 : index
      %46 = vector.load %arg4[%c0_23, %c0_24] : memref<1x32xf32, #tpu.memory_space<vmem>>, vector<1x32xf32>
      %cst_25 = arith.constant dense<0.000000e+00> : vector<8xf32>
      %47 = vector.multi_reduction <add>, %44, %cst_25 [1] : vector<8x32xf32> to vector<8xf32>
      %48 = vector.shape_cast %47 : vector<8xf32> to vector<8x1xf32>
      %cst_26 = arith.constant 3.200000e+01 : f32
      %49 = vector.broadcast %cst_26 : f32 to vector<8x1xf32>
      %50 = arith.divf %48, %49 : vector<8x1xf32>
      %51 = vector.broadcast %50 : vector<8x1xf32> to vector<8x32xf32>
      %52 = arith.subf %44, %51 : vector<8x32xf32>
      %53 = vector.broadcast %50 : vector<8x1xf32> to vector<8x32xf32>
      %54 = arith.subf %44, %53 : vector<8x32xf32>
      %55 = arith.mulf %52, %54 : vector<8x32xf32>
      %cst_27 = arith.constant dense<0.000000e+00> : vector<8xf32>
      %56 = vector.multi_reduction <add>, %55, %cst_27 [1] : vector<8x32xf32> to vector<8xf32>
      %57 = vector.shape_cast %56 : vector<8xf32> to vector<8x1xf32>
      %cst_28 = arith.constant 3.200000e+01 : f32
      %58 = vector.broadcast %cst_28 : f32 to vector<8x1xf32>
      %59 = arith.divf %57, %58 : vector<8x1xf32>
      %60 = vector.broadcast %50 : vector<8x1xf32> to vector<8x32xf32>
      %61 = arith.subf %44, %60 : vector<8x32xf32>
      %cst_29 = arith.constant 9.99999974E-6 : f32
      %62 = vector.broadcast %cst_29 : f32 to vector<8x1xf32>
      %63 = arith.addf %59, %62 : vector<8x1xf32>
      %64 = math.rsqrt %63 : vector<8x1xf32>
      %65 = vector.broadcast %64 : vector<8x1xf32> to vector<8x32xf32>
      %66 = arith.mulf %61, %65 : vector<8x32xf32>
      %67 = vector.broadcast %45 : vector<1x32xf32> to vector<8x32xf32>
      %68 = arith.mulf %66, %67 : vector<8x32xf32>
      %69 = vector.broadcast %46 : vector<1x32xf32> to vector<8x32xf32>
      %70 = arith.addf %68, %69 : vector<8x32xf32>
      %c0_30 = arith.constant 0 : index
      %c0_31 = arith.constant 0 : index
      %c0_32 = arith.constant 0 : index
      %71 = vector.load %arg5[%c0_30, %c0_31, %c0_32] : memref<1x32x96xf32, #tpu.memory_space<vmem>>, vector<1x32x96xf32>
      %72 = vector.shape_cast %71 : vector<1x32x96xf32> to vector<32x96xf32>
      %cst_33 = arith.constant dense<0.000000e+00> : vector<8x96xf32>
      %73 = tpu.matmul %70, %72, %cst_33 {dimension_numbers = #tpu.dot_dimension_numbers<[1], [0], [0], [1], [0, 0, 1, 1], [], []>} : vector<8x32xf32>, vector<32x96xf32>, vector<8x96xf32> -> vector<8x96xf32>
      %c0_34 = arith.constant 0 : index
      %c0_35 = arith.constant 0 : index
      %c0_36 = arith.constant 0 : index
      %74 = vector.load %arg6[%c0_34, %c0_35, %c0_36] : memref<1x1x96xf32, #tpu.memory_space<vmem>>, vector<1x1x96xf32>
      %75 = vector.shape_cast %74 : vector<1x1x96xf32> to vector<1x96xf32>
      %76 = vector.broadcast %75 : vector<1x96xf32> to vector<8x96xf32>
      %77 = arith.addf %73, %76 : vector<8x96xf32>
      %78 = vector.extract_strided_slice %77 {offsets = [0, 0], sizes = [8, 32], strides = [1, 1]} : vector<8x96xf32> to vector<8x32xf32>
      %c0_37 = arith.constant 0 : index
      %c0_38 = arith.constant 0 : index
      %79 = vector.load %arg8[%c0_37, %c0_38] : memref<8x32xf32, #tpu.memory_space<vmem>>, vector<8x32xf32>
      tpu.vector_store %arg8[%c0_37, %c0_38], %78 {strides = array<i32>} : memref<8x32xf32, #tpu.memory_space<vmem>>, vector<8x32xf32>,
      %80 = vector.extract_strided_slice %77 {offsets = [0, 32], sizes = [8, 32], strides = [1, 1]} : vector<8x96xf32> to vector<8x32xf32>
      %c0_39 = arith.constant 0 : index
      %c0_40 = arith.constant 0 : index
      %81 = vector.load %arg9[%c0_39, %c0_40] : memref<8x64xf32, #tpu.memory_space<vmem>>, vector<8x32xf32>
      tpu.vector_store %arg9[%c0_39, %c0_40], %80 {strides = array<i32>} : memref<8x64xf32, #tpu.memory_space<vmem>>, vector<8x32xf32>,
      %82 = vector.extract_strided_slice %77 {offsets = [0, 64], sizes = [8, 32], strides = [1, 1]} : vector<8x96xf32> to vector<8x32xf32>
      %c0_41 = arith.constant 0 : index
      %c32_42 = arith.constant 32 : index
      %83 = vector.load %arg9[%c0_41, %c32_42] : memref<8x64xf32, #tpu.memory_space<vmem>>, vector<8x32xf32>
      tpu.vector_store %arg9[%c0_41, %c32_42], %82 {strides = array<i32>} : memref<8x64xf32, #tpu.memory_space<vmem>>, vector<8x32xf32>,
    } else {
    }
    %c8_i32 = arith.constant 8 : i32
    %3 = arith.muli %arg1, %c8_i32 : i32
    %4 = tpu.assume_multiple %3, 8 : i32
    %c0 = arith.constant 0 : index
    %5 = arith.index_cast %4 : i32 to index
    %c0_1 = arith.constant 0 : index
    %6 = vector.load %arg2[%c0, %5, %c0_1] : memref<1x8x32xf32, #tpu.memory_space<vmem>>, vector<1x8x32xf32>
    %7 = vector.shape_cast %6 : vector<1x8x32xf32> to vector<8x32xf32>
    %8 = arith.index_cast %4 : i32 to index
    %c0_2 = arith.constant 0 : index
    %9 = vector.load %arg8[%8, %c0_2] : memref<8x32xf32, #tpu.memory_space<vmem>>, vector<8x32xf32>
    %10 = vector.extract_strided_slice %9 {offsets = [0, 0], sizes = [8, 16], strides = [1, 1]} : vector<8x32xf32> to vector<8x16xf32>
    %c0_3 = arith.constant 0 : index
    %c0_4 = arith.constant 0 : index
    %11 = vector.load %arg9[%c0_3, %c0_4] : memref<8x64xf32, #tpu.memory_space<vmem>>, vector<8x16xf32>
    %c0_5 = arith.constant 0 : index
    %c32 = arith.constant 32 : index
    %12 = vector.load %arg9[%c0_5, %c32] : memref<8x64xf32, #tpu.memory_space<vmem>>, vector<8x16xf32>
    %cst = arith.constant dense<0.000000e+00> : vector<8x8xf32>
    %13 = tpu.matmul %10, %11, %cst {dimension_numbers = #tpu.dot_dimension_numbers<[1], [1], [0], [0], [0, 0, 1, 0], [], []>} : vector<8x16xf32>, vector<8x16xf32>, vector<8x8xf32> -> vector<8x8xf32>
    %cst_6 = arith.constant dense<0xFF800000> : vector<8xf32>
    %14 = vector.multi_reduction <maximumf>, %13, %cst_6 [1] : vector<8x8xf32> to vector<8xf32>
    %15 = vector.shape_cast %14 : vector<8xf32> to vector<8x1xf32>
    %16 = vector.broadcast %15 : vector<8x1xf32> to vector<8x8xf32>
    %17 = arith.subf %13, %16 : vector<8x8xf32>
    %18 = math.exp %17 : vector<8x8xf32>
    %cst_7 = arith.constant dense<0.000000e+00> : vector<8xf32>
    %19 = vector.multi_reduction <add>, %18, %cst_7 [1] : vector<8x8xf32> to vector<8xf32>
    %20 = vector.shape_cast %19 : vector<8xf32> to vector<8x1xf32>
    %cst_8 = arith.constant dense<0.000000e+00> : vector<8x16xf32>
    %21 = tpu.matmul %18, %12, %cst_8 {dimension_numbers = #tpu.dot_dimension_numbers<[1], [0], [0], [1], [0, 0, 1, 1], [], []>} : vector<8x8xf32>, vector<8x16xf32>, vector<8x16xf32> -> vector<8x16xf32>
    %22 = vector.broadcast %20 : vector<8x1xf32> to vector<8x16xf32>
    %23 = arith.divf %21, %22 : vector<8x16xf32>
    %24 = vector.extract_strided_slice %9 {offsets = [0, 16], sizes = [8, 16], strides = [1, 1]} : vector<8x32xf32> to vector<8x16xf32>
    %c0_9 = arith.constant 0 : index
    %c16 = arith.constant 16 : index
    %25 = vector.load %arg9[%c0_9, %c16] : memref<8x64xf32, #tpu.memory_space<vmem>>, vector<8x16xf32>
    %c0_10 = arith.constant 0 : index
    %c48 = arith.constant 48 : index
    %26 = vector.load %arg9[%c0_10, %c48] : memref<8x64xf32, #tpu.memory_space<vmem>>, vector<8x16xf32>
    %cst_11 = arith.constant dense<0.000000e+00> : vector<8x8xf32>
    %27 = tpu.matmul %24, %25, %cst_11 {dimension_numbers = #tpu.dot_dimension_numbers<[1], [1], [0], [0], [0, 0, 1, 0], [], []>} : vector<8x16xf32>, vector<8x16xf32>, vector<8x8xf32> -> vector<8x8xf32>
    %cst_12 = arith.constant dense<0xFF800000> : vector<8xf32>
    %28 = vector.multi_reduction <maximumf>, %27, %cst_12 [1] : vector<8x8xf32> to vector<8xf32>
    %29 = vector.shape_cast %28 : vector<8xf32> to vector<8x1xf32>
    %30 = vector.broadcast %29 : vector<8x1xf32> to vector<8x8xf32>
    %31 = arith.subf %27, %30 : vector<8x8xf32>
    %32 = math.exp %31 : vector<8x8xf32>
    %cst_13 = arith.constant dense<0.000000e+00> : vector<8xf32>
    %33 = vector.multi_reduction <add>, %32, %cst_13 [1] : vector<8x8xf32> to vector<8xf32>
    %34 = vector.shape_cast %33 : vector<8xf32> to vector<8x1xf32>
    %cst_14 = arith.constant dense<0.000000e+00> : vector<8x16xf32>
    %35 = tpu.matmul %32, %26, %cst_14 {dimension_numbers = #tpu.dot_dimension_numbers<[1], [0], [0], [1], [0, 0, 1, 1], [], []>} : vector<8x8xf32>, vector<8x16xf32>, vector<8x16xf32> -> vector<8x16xf32>
    %36 = vector.broadcast %34 : vector<8x1xf32> to vector<8x16xf32>
    %37 = arith.divf %35, %36 : vector<8x16xf32>
    %38 = tpu.concatenate %23, %37 in 1 : vector<8x16xf32>, vector<8x16xf32> -> vector<8x32xf32>
    %39 = arith.addf %7, %38 : vector<8x32xf32>
    %c0_15 = arith.constant 0 : index
    %c0_16 = arith.constant 0 : index
    %c0_17 = arith.constant 0 : index
    %40 = vector.load %arg7[%c0_15, %c0_16, %c0_17] : memref<1x8x32xf32, #tpu.memory_space<vmem>>, vector<1x8x32xf32>
    %41 = vector.shape_cast %40 : vector<1x8x32xf32> to vector<8x32xf32>
    %42 = vector.shape_cast %39 : vector<8x32xf32> to vector<1x8x32xf32>
    tpu.vector_store %arg7[%c0_15, %c0_16, %c0_17], %42 {strides = array<i32>} : memref<1x8x32xf32, #tpu.memory_space<vmem>>, vector<1x8x32xf32>,
    return
  }
  func.func @transform_0(%arg0: i32, %arg1: i32) -> (i32, i32, i32) {
    %c0_i32 = arith.constant 0 : i32
    %c0_i32_0 = arith.constant 0 : i32
    %c0_i32_1 = arith.constant 0 : i32
    return %arg0, %c0_i32, %c0_i32_0 : i32, i32, i32
  }
  func.func @transform_1(%arg0: i32, %arg1: i32) -> (i32, i32) {
    %c0_i32 = arith.constant 0 : i32
    %c0_i32_0 = arith.constant 0 : i32
    %c0_i32_1 = arith.constant 0 : i32
    return %c0_i32, %c0_i32_0 : i32, i32
  }
  func.func @transform_2(%arg0: i32, %arg1: i32) -> (i32, i32) {
    %c0_i32 = arith.constant 0 : i32
    %c0_i32_0 = arith.constant 0 : i32
    %c0_i32_1 = arith.constant 0 : i32
    return %c0_i32, %c0_i32_0 : i32, i32
  }
  func.func @transform_3(%arg0: i32, %arg1: i32) -> (i32, i32, i32) {
    %c0_i32 = arith.constant 0 : i32
    %c0_i32_0 = arith.constant 0 : i32
    %c0_i32_1 = arith.constant 0 : i32
    %c0_i32_2 = arith.constant 0 : i32
    return %c0_i32, %c0_i32_0, %c0_i32_1 : i32, i32, i32
  }
  func.func @transform_4(%arg0: i32, %arg1: i32) -> (i32, i32, i32) {
    %c0_i32 = arith.constant 0 : i32
    %c0_i32_0 = arith.constant 0 : i32
    %c0_i32_1 = arith.constant 0 : i32
    %c0_i32_2 = arith.constant 0 : i32
    return %c0_i32, %c0_i32_0, %c0_i32_1 : i32, i32, i32
  }
  func.func @transform_5(%arg0: i32, %arg1: i32) -> (i32, i32, i32) {
    %c0_i32 = arith.constant 0 : i32
    %c0_i32_0 = arith.constant 0 : i32
    return %arg0, %arg1, %c0_i32 : i32, i32, i32
  }
}

</mosaic_0001>

<llo_original>
// kernel: tpu_custom_call.1
$region0: #{tpu_custom_call.1}
  #allocation0 [shape = 'u32[]', space=smem, size = 0x4, offset = 0x4, fixed_abs, tag = 'smem constant byte address 0x4 - core index']
  #allocation1 [shape = 'u32[144,128]{1,0:T(1,128)}', space=vmem, size = 0x12000, scoped, tag = 'internal scratch']
  #allocation2 [shape = 'f32[8,32]{1,0:T(8,128)}', space=vmem, size = 0x1000, scoped, tag = 'scratch operand']
  #allocation3 [shape = 'f32[8,64]{1,0:T(8,128)}', space=vmem, size = 0x1000, scoped, tag = 'scratch operand']
  %s0 = inlined_call_operand.hbm [shape: f32[2,8,32], index: 0, kind: input, shape index: {}]
  %s1 = inlined_call_operand.vmem [shape: f32[1,32], index: 1, kind: input, shape index: {}]
  %s2 = inlined_call_operand.vmem [shape: f32[1,32], index: 2, kind: input, shape index: {}]
  %s3 = inlined_call_operand.hbm [shape: f32[1,32,96], index: 3, kind: input, shape index: {}]
  %s4 = inlined_call_operand.vmem [shape: f32[1,1,96], index: 4, kind: input, shape index: {}]
  %s5 = inlined_call_operand.hbm [shape: f32[2,8,32], index: 5, kind: output, shape index: {}]
  %s6 = sld [smem:[#allocation0]]
  $region65: #{tpu_custom_call.1} parent=0
    _
  %s8 = ssub.s32 1, %s6
  %s9 = scalar_select 0, %s8, %s6
  $region1: #{tpu_custom_call.1} parent=0
    #allocation4 [shape = 'u8[8192]{0}', space=vmem, size = 0x2000, scoped, tag = 'input window, operand 0']
    #allocation5 [shape = 's32[2]{0}', space=sflag, size = 0x8, scoped, tag = 'scoped memory for tpu_custom_call.1']
    #allocation6 [shape = 's32[2]{0}', space=sflag, size = 0x8, scoped, tag = 'scoped memory for tpu_custom_call.1']
    #allocation7 [shape = 'u8[16384]{0}', space=vmem, size = 0x4000, scoped, tag = 'input window, operand 3, single buffered']
    #allocation8 [shape = 's32[1]{0}', space=sflag, size = 0x4, scoped, tag = 'scoped memory for tpu_custom_call.1']
    #allocation9 [shape = 'u8[8192]{0}', space=vmem, size = 0x2000, scoped, tag = 'output window, operand 0']
    %10 = vsyncpa [#allocation5], 0
    %s11 = scalar_lea.sflag [#allocation5], 1
    %12 = vsyncpa %s11, 0
    %13 = vsyncpa [#allocation8], 0
    %14 = vsyncpa [#allocation6], 0
    %s15 = scalar_lea.sflag [#allocation6], 1
    %16 = vsyncpa %s15, 0
    loop: start=0, step=1, limit=4
    $region2: #{tpu_custom_call.1} parent=1 // loop_pre_header
      _
    $region3: #{tpu_custom_call.1} parent=1 // loop_header
      %s18 = sphi 0, %s22
      %p19 = scmp.ge.s32.totalorder %s18, 4
      %s25 = sphi 0, %s37
      %s26 = sphi 0, %s33
      %s27 = sphi 0, %s25
      %s28 = sphi 0, %s26
      %s29 = sphi 0, %s27
      %s30 = sphi 0, %s28
      %s40 = sphi 0, %s42
      %s43 = sphi 0, %s40
      %s44 = sphi 0, %s43
      %s60 = sphi 0, %s44
      %s64 = sphi 0, %s64
      %s66 = sphi 0, %s64
      %s67 = sphi 0, %s66
      %s81 = sphi 0, %s67
      %s85 = sphi 0, %s85
      %s87 = sphi 0, %s85
      %s88 = sphi 0, %s87
      %s102 = sphi 0, %s88
      %s106 = sphi 0, %s106
      %s108 = sphi 0, %s106
      %s109 = sphi 0, %s108
      %s123 = sphi 0, %s109
      %s127 = sphi 0, %s127
      %s129 = sphi 0, %s127
      %s130 = sphi 0, %s129
      %s144 = sphi 0, %s130
      %s152 = sphi 0, %s154
      %s155 = sphi 0, %s152
      %s156 = sphi 0, %s155
      %s172 = sphi 0, %s156
    $region4: #{tpu_custom_call.1} parent=1 // loop_header_branch
      %21 = sbr.rel (%p19) target = $region8
    $region5: #{tpu_custom_call.1} parent=1 // loop_body
      %s23 = ssub.s32 %s18, 1
      %s24 = ssub.s32 %s18, 2
      %s31 = sadd.s32 1, %s26
      %p32 = scmp.ge.s32.totalorder %s31, 1
      %s33 = scalar_select %p32, 0, %s31
      %s34 = sadd.s32 1, %s25
      %s35 = scalar_select %p32, %s34, %s25
      %p36 = scmp.ge.s32.totalorder %s35, 2
      %s37 = scalar_select %p36, 0, %s35
      %s38 = ssub.s32 %s25, %s37
      %p39 = scmp.eq.s32.totalorder %s38, 0
      %s41 = sadd.s32 %s40, 1
      %s42 = scalar_select %p39, %s40, %s41
      %p45 = pneg %p39
      %p46 = scmp.eq.s32.totalorder %s18, 1
      %p47 = por %p45, %p46
      %p48 = scmp.ne.s32.totalorder %s40, %s43
      %p49 = scmp.eq.s32.totalorder %s18, 0
      %p50 = por %p48, %p49
      %p51 = scmp.ne.s32.totalorder %s40, %s43
      %p52 = scmp.eq.s32.totalorder %s23, 1
      %p53 = por %p51, %p52
      %p54 = scmp.ne.s32.totalorder %s43, %s44
      %p55 = scmp.eq.s32.totalorder %s23, 0
      %p56 = por %p54, %p55
      %p57 = scmp.ne.s32.totalorder %s43, %s44
      %p58 = scmp.eq.s32.totalorder %s24, 1
      %p59 = por %p57, %p58
      %p61 = scmp.ne.s32.totalorder %s44, %s60
      %p62 = scmp.eq.s32.totalorder %s24, 0
      %p63 = por %p61, %p62
      %s65 = sadd.s32 %s64, 1
      %p68 = scmp.eq.s32.totalorder %s18, 1
      %p69 = scmp.ne.s32.totalorder %s64, %s66
      %p70 = scmp.eq.s32.totalorder %s18, 0
      %p71 = por %p69, %p70
      %p72 = scmp.ne.s32.totalorder %s64, %s66
      %p73 = scmp.eq.s32.totalorder %s23, 1
      %p74 = por %p72, %p73
      %p75 = scmp.ne.s32.totalorder %s66, %s67
      %p76 = scmp.eq.s32.totalorder %s23, 0
      %p77 = por %p75, %p76
      %p78 = scmp.ne.s32.totalorder %s66, %s67
      %p79 = scmp.eq.s32.totalorder %s24, 1
      %p80 = por %p78, %p79
      %p82 = scmp.ne.s32.totalorder %s67, %s81
      %p83 = scmp.eq.s32.totalorder %s24, 0
      %p84 = por %p82, %p83
      %s86 = sadd.s32 %s85, 1
      %p89 = scmp.eq.s32.totalorder %s18, 1
      %p90 = scmp.ne.s32.totalorder %s85, %s87
      %p91 = scmp.eq.s32.totalorder %s18, 0
      %p92 = por %p90, %p91
      %p93 = scmp.ne.s32.totalorder %s85, %s87
      %p94 = scmp.eq.s32.totalorder %s23, 1
      %p95 = por %p93, %p94
      %p96 = scmp.ne.s32.totalorder %s87, %s88
      %p97 = scmp.eq.s32.totalorder %s23, 0
      %p98 = por %p96, %p97
      %p99 = scmp.ne.s32.totalorder %s87, %s88
      %p100 = scmp.eq.s32.totalorder %s24, 1
      %p101 = por %p99, %p100
      %p103 = scmp.ne.s32.totalorder %s88, %s102
      %p104 = scmp.eq.s32.totalorder %s24, 0
      %p105 = por %p103, %p104
      %s107 = sadd.s32 %s106, 1
      %p110 = scmp.eq.s32.totalorder %s18, 1
      %p111 = scmp.ne.s32.totalorder %s106, %s108
      %p112 = scmp.eq.s32.totalorder %s18, 0
      %p113 = por %p111, %p112
      %p114 = scmp.ne.s32.totalorder %s106, %s108
      %p115 = scmp.eq.s32.totalorder %s23, 1
      %p116 = por %p114, %p115
      %p117 = scmp.ne.s32.totalorder %s108, %s109
      %p118 = scmp.eq.s32.totalorder %s23, 0
      %p119 = por %p117, %p118
      %p120 = scmp.ne.s32.totalorder %s108, %s109
      %p121 = scmp.eq.s32.totalorder %s24, 1
      %p122 = por %p120, %p121
      %p124 = scmp.ne.s32.totalorder %s109, %s123
      %p125 = scmp.eq.s32.totalorder %s24, 0
      %p126 = por %p124, %p125
      %s128 = sadd.s32 %s127, 1
      %p131 = scmp.eq.s32.totalorder %s18, 1
      %p132 = scmp.ne.s32.totalorder %s127, %s129
      %p133 = scmp.eq.s32.totalorder %s18, 0
      %p134 = por %p132, %p133
      %p135 = scmp.ne.s32.totalorder %s127, %s129
      %p136 = scmp.eq.s32.totalorder %s23, 1
      %p137 = por %p135, %p136
      %p138 = scmp.ne.s32.totalorder %s129, %s130
      %p139 = scmp.eq.s32.totalorder %s23, 0
      %p140 = por %p138, %p139
      %p141 = scmp.ne.s32.totalorder %s129, %s130
      %p142 = scmp.eq.s32.totalorder %s24, 1
      %p143 = por %p141, %p142
      %p145 = scmp.ne.s32.totalorder %s130, %s144
      %p146 = scmp.eq.s32.totalorder %s24, 0
      %p147 = por %p145, %p146
      %s148 = ssub.s32 %s25, %s37
      %s149 = ssub.s32 %s26, %s33
      %s150 = sor.u32 %s148, %s149
      %p151 = scmp.eq.s32.totalorder %s150, 0
      %s153 = sadd.s32 %s152, 1
      %s154 = scalar_select %p151, %s152, %s153
      %p157 = pneg %p151
      %p158 = scmp.eq.s32.totalorder %s18, 1
      %p159 = por %p157, %p158
      %p160 = scmp.ne.s32.totalorder %s152, %s155
      %p161 = scmp.eq.s32.totalorder %s18, 0
      %p162 = por %p160, %p161
      %p163 = scmp.ne.s32.totalorder %s152, %s155
      %p164 = scmp.eq.s32.totalorder %s23, 1
      %p165 = por %p163, %p164
      %p166 = scmp.ne.s32.totalorder %s155, %s156
      %p167 = scmp.eq.s32.totalorder %s23, 0
      %p168 = por %p166, %p167
      %p169 = scmp.ne.s32.totalorder %s155, %s156
      %p170 = scmp.eq.s32.totalorder %s24, 1
      %p171 = por %p169, %p170
      %p173 = scmp.ne.s32.totalorder %s156, %s172
      %p174 = scmp.eq.s32.totalorder %s24, 0
      %p175 = por %p173, %p174
      %p176 = scmp.le.s32.totalorder 1, %s18
      %p177 = scmp.lt.s32.totalorder %s18, 3
      %p178 = pnand %p176, %p177
      %p179 = pneg %p178
      // Predicated region
      $region9: #{tpu_custom_call.1} parent=5 // pred_check
        _
      $region10: #{tpu_custom_call.1} parent=5 // pred_check_branch
        %181 = sbr.rel (%p178) target = $region12
      $region11: #{tpu_custom_call.1} parent=5 // pred_region
        %s182 = ssub.s32 %s18, 1
        // Predicated region
        $region13: #{tpu_custom_call.1} parent=11 // pred_check
          %p183 = pneg %p77
        $region14: #{tpu_custom_call.1} parent=11 // pred_check_branch
          %185 = sbr.rel (%p183) target = $region16
        $region15: #{tpu_custom_call.1} parent=11 // pred_region
          _
        $region16: #{tpu_custom_call.1} parent=11 // pred_fallthru
          _
        // Predicated region
        $region17: #{tpu_custom_call.1} parent=11 // pred_check
          %p186 = pneg %p98
        $region18: #{tpu_custom_call.1} parent=11 // pred_check_branch
          %188 = sbr.rel (%p186) target = $region20
        $region19: #{tpu_custom_call.1} parent=11 // pred_region
          _
        $region20: #{tpu_custom_call.1} parent=11 // pred_fallthru
          _
        // Predicated region
        $region21: #{tpu_custom_call.1} parent=11 // pred_check
          %p189 = pneg %p119
        $region22: #{tpu_custom_call.1} parent=11 // pred_check_branch
          %191 = sbr.rel (%p189) target = $region24
        $region23: #{tpu_custom_call.1} parent=11 // pred_region
          %s193 = ssub.s32 512, 512
          %194 = vsyncadd [#allocation8], %s193
          %s195 = sshll.u32 [#allocation7], 4
          %s196 = int_to_ptr.vmem [resolvable:$true] %s195
          %201 = dma.hbm_to_vmem [thread:$0]  %s3, 512, %s196, [#allocation8], 128, 128, 8
        $region24: #{tpu_custom_call.1} parent=11 // pred_fallthru
          _
        // Predicated region
        $region25: #{tpu_custom_call.1} parent=11 // pred_check
          %p202 = pneg %p140
        $region26: #{tpu_custom_call.1} parent=11 // pred_check_branch
          %204 = sbr.rel (%p202) target = $region28
        $region27: #{tpu_custom_call.1} parent=11 // pred_region
          _
        $region28: #{tpu_custom_call.1} parent=11 // pred_fallthru
          _
      $region12: #{tpu_custom_call.1} parent=5 // pred_fallthru
        _
      %p205 = scmp.lt.s32.totalorder %s18, 2
      // Predicated region
      $region29: #{tpu_custom_call.1} parent=5 // pred_check
        %p206 = pneg %p205
      $region30: #{tpu_custom_call.1} parent=5 // pred_check_branch
        %208 = sbr.rel (%p206) target = $region32
      $region31: #{tpu_custom_call.1} parent=5 // pred_region
        // Predicated region
        $region33: #{tpu_custom_call.1} parent=31 // pred_check
          %p209 = pneg %p50
        $region34: #{tpu_custom_call.1} parent=31 // pred_check_branch
          %211 = sbr.rel (%p209) target = $region36
        $region35: #{tpu_custom_call.1} parent=31 // pred_region
          %s212 = sand.u32 %s40, 1
          %s213 = scalar_lea.sflag [#allocation5], %s212
          %s214 = sand.u32 %s40, 1
          %s215 = smul.addr %s214, 8
          %s216 = scalar_lea.vmem [#allocation4], %s215
          %s218 = ssub.s32 128, 128
          %219 = vsyncadd %s213, %s218
          %s220 = smul.addr %s25, 128
          %s221 = scalar_lea.hbm %s0, %s220
          %s223 = sshll.u32 %s216, 4
          %s224 = int_to_ptr.vmem [resolvable:$true] %s223
          %226 = dma.hbm_to_vmem [thread:$0]  %s221, 128, %s224, %s213
        $region36: #{tpu_custom_call.1} parent=31 // pred_fallthru
          _
      $region32: #{tpu_custom_call.1} parent=5 // pred_fallthru
        _
      %p227 = scmp.le.s32.totalorder 1, %s18
      %p228 = scmp.lt.s32.totalorder %s18, 3
      %p229 = pnand %p227, %p228
      %p230 = pneg %p229
      // Predicated region
      $region37: #{tpu_custom_call.1} parent=5 // pred_check
        _
      $region38: #{tpu_custom_call.1} parent=5 // pred_check_branch
        %232 = sbr.rel (%p229) target = $region40
      $region39: #{tpu_custom_call.1} parent=5 // pred_region
        %s233 = ssub.s32 %s18, 1
        %s234 = sand.u32 %s43, 1
        %s235 = scalar_lea.sflag [#allocation5], %s234
        %s236 = sand.u32 %s43, 1
        %s237 = smul.addr %s236, 8
        %s238 = scalar_lea.vmem [#allocation4], %s237
        // Predicated region
        $region41: #{tpu_custom_call.1} parent=39 // pred_check
          %p239 = pneg %p56
        $region42: #{tpu_custom_call.1} parent=39 // pred_check_branch
          %241 = sbr.rel (%p239) target = $region44
        $region43: #{tpu_custom_call.1} parent=39 // pred_region
          %242 = dma.done %s235, 128
        $region44: #{tpu_custom_call.1} parent=39 // pred_fallthru
          _
        // Predicated region
        $region45: #{tpu_custom_call.1} parent=39 // pred_check
          %p243 = pneg %p119
        $region46: #{tpu_custom_call.1} parent=39 // pred_check_branch
          %245 = sbr.rel (%p243) target = $region48
        $region47: #{tpu_custom_call.1} parent=39 // pred_region
          %246 = dma.done [#allocation8], 512
        $region48: #{tpu_custom_call.1} parent=39 // pred_fallthru
          _
        %s247 = sand.u32 %s43, 1
        %s248 = scalar_lea.sflag [#allocation5], %s247
        %s249 = sand.u32 %s43, 1
        %s250 = smul.addr %s249, 8
        %s251 = scalar_lea.vmem [#allocation4], %s250
        %p252 = pneg %p56
        %p253 = pneg %p53
        %p254 = pneg %p77
        %p255 = pneg %p74
        %p256 = pneg %p98
        %p257 = pneg %p95
        %p258 = pneg %p119
        %p259 = pneg %p116
        %p260 = pneg %p140
        %p261 = pneg %p137
        %p262 = pneg %p168
        %p263 = pneg %p165
        %s264 = sand.u32 %s155, 1
        %s265 = scalar_lea.sflag [#allocation6], %s264
        %s266 = sand.u32 %s155, 1
        %s267 = smul.addr %s266, 8
        %s268 = scalar_lea.vmem [#allocation9], %s267
        %p269 = scmp.eq.s32.totalorder %s28, 0
        // Predicated region
        $region49: #{tpu_custom_call.1} parent=39 // pred_check
          %p270 = pneg %p269
        $region50: #{tpu_custom_call.1} parent=39 // pred_check_branch
          %272 = sbr.rel (%p270) target = $region52
        $region51: #{tpu_custom_call.1} parent=39 // pred_region
          %v273 = vld [vmem:[%s238] sm:$0xff]
          %v274 = vld [vmem:[%s1] sm:$0x1]
          %v275 = vld [vmem:[%s2] sm:$0x1]
          %vm276 = vcmask 261120
          %v277 = vsel %vm276, %v273, 0.0
          %278 = vadd.xlane.f32.xlu0 %v277
          %v279 = vpop.xlane.xlu0 %278
          %v280 = vrcp.pop 32.0
          %v281 = vmul.f32 %v279, %v280
          %v282 = vsub.f32 %v273, %v281
          %v283 = vmul.f32 %v282, %v282
          %v284 = vsel %vm276, %v283, 0.0
          %285 = vadd.xlane.f32.xlu0 %v284
          %v286 = vpop.xlane.xlu0 %285
          %v287 = vmul.f32 %v286, %v280
          %v288 = vadd.f32 %v287, 1e-05
          %v289 = vrsqrt.pop %v288
          %v290 = vmul.f32 %v282, %v289
          %v292 = vlaneseq
          %v293 = vshrl.u32 %v292, 7
          %v294 = vsub.s32 0, %v293
          %v295 = vrot.slane %v274, %v294
          %v297 = vmul.f32 %v290, %v295
          %v299 = vlaneseq
          %v300 = vshrl.u32 %v299, 7
          %v301 = vsub.s32 0, %v300
          %v302 = vrot.slane %v275, %v301
          %v304 = vadd.f32 %v297, %v302
          %v305 = vld [vmem:[#allocation7] sm:$0xff]
          %v306 = vld [vmem:[#allocation7 + $0x8] sm:$0xff]
          %v307 = vld [vmem:[#allocation7 + $0x10] sm:$0xff]
          %v308 = vld [vmem:[#allocation7 + $0x18] sm:$0xff]
          %v309 = vld [vmem:[%s4] sm:$0x1]
          %v311 = vlaneseq
          %v312 = vshrl.u32 %v311, 7
          %v313 = vsub.s32 0, %v312
          %v314 = vrot.slane %v309, %v313
          %v317 = vsel %vm276, %v304, 0
          %319 = vmatprep.subr.mxu0 0.0
          %320 = vmatpush1.msra.mxu0 %v305
          %321 = vmatprep.subr.mxu0 0.0
          %322 = vmatpush1.msra.mxu0 %v306
          %323 = vmatprep.subr.mxu0 0.0
          %324 = vmatpush1.msra.mxu0 %v307
          %325 = vmatprep.subr.mxu0 0.0
          %326 = vmatpush1.msra.mxu0 %v308
          %327 = vmatprep.subr.mxu0 0.0
          %328 = vmatpush1.msra.mxu0 0.0
          %329 = vmatprep.subr.mxu0 0.0
          %330 = vmatpush1.msra.mxu0 0.0
          %331 = vmatprep.subr.mxu0 0.0
          %332 = vmatpush1.msra.mxu0 0.0
          %333 = vmatprep.subr.mxu0 0.0
          %334 = vmatpush1.msra.mxu0 0.0
          %335 = vmatprep.subr.mxu0 0.0
          %336 = vmatpush1.msra.mxu0 0.0
          %337 = vmatprep.subr.mxu0 0.0
          %338 = vmatpush1.msra.mxu0 0.0
          %339 = vmatprep.subr.mxu0 0.0
          %340 = vmatpush1.msra.mxu0 0.0
          %341 = vmatprep.subr.mxu0 0.0
          %342 = vmatpush1.msra.mxu0 0.0
          %343 = vmatprep.subr.mxu0 0.0
          %344 = vmatpush1.msra.mxu0 0.0
          %345 = vmatprep.subr.mxu0 0.0
          %346 = vmatpush1.msra.mxu0 0.0
          %347 = vmatprep.subr.mxu0 0.0
          %348 = vmatpush1.msra.mxu0 0.0
          %349 = vmatprep.subr.mxu0 0.0
          %350 = vmatpush1.msra.mxu0 0.0
          %351 = vmatprep.subr.mxu0 0.0
          %352 = vmatpush1.msra.mxu0 0.0
          %353 = vmatprep.subr.mxu0 0.0
          %354 = vmatpush1.msra.mxu0 0.0
          %355 = vmatprep.subr.mxu0 0.0
          %356 = vmatpush1.msra.mxu0 0.0
          %357 = vmatprep.subr.mxu0 0.0
          %358 = vmatpush1.msra.mxu0 0.0
          %359 = vmatprep.subr.mxu0 0.0
          %360 = vmatpush1.msra.mxu0 0.0
          %361 = vmatprep.subr.mxu0 0.0
          %362 = vmatpush1.msra.mxu0 0.0
          %363 = vmatprep.subr.mxu0 0.0
          %364 = vmatpush1.msra.mxu0 0.0
          %365 = vmatprep.subr.mxu0 0.0
          %366 = vmatpush1.msra.mxu0 0.0
          %367 = vmatprep.subr.mxu0 0.0
          %368 = vmatpush1.msra.mxu0 0.0
          %369 = vmatprep.subr.mxu0 0.0
          %370 = vmatpush1.msra.mxu0 0.0
          %371 = vmatprep.subr.mxu0 0.0
          %372 = vmatpush1.msra.mxu0 0.0
          %373 = vmatprep.subr.mxu0 0.0
          %374 = vmatpush1.msra.mxu0 0.0
          %375 = vmatprep.subr.mxu0 0.0
          %376 = vmatpush1.msra.mxu0 0.0
          %377 = vmatprep.subr.mxu0 0.0
          %378 = vmatpush1.msra.mxu0 0.0
          %379 = vmatprep.subr.mxu0 0.0
          %380 = vmatpush1.msra.mxu0 0.0
          %381 = vmatprep.subr.mxu0 0.0
          %382 = vmatpush1.msra.mxu0 0.0
          %383 = vmatprep.mubr.f32.mxu0 0.0
          %384 = vmatmul.mubr.f32.gmra.mrb[0].mxu0 %v317
          %v385 = vpop.f32.mrb[0].mxu0
          %v386 = vadd.f32 %v314, %v385
          %v387 = vpop.f32.mrb[0].mxu0
          %388 = vdwg.mxu0
          %389 = vst.msk [vmem:[#allocation2] sm:$0xff] %vm276, %v386
          %391 = vrot.lane.b32.xlu0 %v386, 96
          %v392 = vpop.permute.xlu0 %391
          %394 = vst.msk [vmem:[#allocation3] sm:$0xff] %vm276, %v392
          %vm395 = vcmask 523520
          %396 = vst.msk [vmem:[#allocation3] sm:$0xff] %vm395, %v392
        $region52: #{tpu_custom_call.1} parent=39 // pred_fallthru
          _
        %s397 = smul.u32 %s28, 8
        %s398 = scalar_lea.vmem %s238, %s397 [#allocation4]
        %v399 = vld [vmem:[%s398] sm:$0xff]
        %s400 = scalar_lea.vmem [#allocation2], %s397
        %v401 = vld [vmem:[%s400] sm:$0xff]
        %v402 = vld [vmem:[#allocation3] sm:$0xff]
        %vm403 = vcmask 130048
        %v405 = vsel %vm403, %v401, 0
        %v408 = vsel %vm403, %v402, 0
        %410 = vmatprep.subr.mxu0 0.0
        %411 = vmatpush1.xpose.msra.mxu0 %v408
        %412 = vmatprep.subr.mxu0 0.0
        %413 = vmatpush1.xpose.msra.mxu0 0.0
        %414 = vmatprep.subr.mxu0 0.0
        %415 = vmatpush1.xpose.msra.mxu0 0.0
        %416 = vmatprep.subr.mxu0 0.0
        %417 = vmatpush1.xpose.msra.mxu0 0.0
        %418 = vmatprep.subr.mxu0 0.0
        %419 = vmatpush1.xpose.msra.mxu0 0.0
        %420 = vmatprep.subr.mxu0 0.0
        %421 = vmatpush1.xpose.msra.mxu0 0.0
        %422 = vmatprep.subr.mxu0 0.0
        %423 = vmatpush1.xpose.msra.mxu0 0.0
        %424 = vmatprep.subr.mxu0 0.0
        %425 = vmatpush1.xpose.msra.mxu0 0.0
        %426 = vmatprep.subr.mxu0 0.0
        %427 = vmatpush1.xpose.msra.mxu0 0.0
        %428 = vmatprep.subr.mxu0 0.0
        %429 = vmatpush1.xpose.msra.mxu0 0.0
        %430 = vmatprep.subr.mxu0 0.0
        %431 = vmatpush1.xpose.msra.mxu0 0.0
        %432 = vmatprep.subr.mxu0 0.0
        %433 = vmatpush1.xpose.msra.mxu0 0.0
        %434 = vmatprep.subr.mxu0 0.0
        %435 = vmatpush1.xpose.msra.mxu0 0.0
        %436 = vmatprep.subr.mxu0 0.0
        %437 = vmatpush1.xpose.msra.mxu0 0.0
        %438 = vmatprep.subr.mxu0 0.0
        %439 = vmatpush1.xpose.msra.mxu0 0.0
        %440 = vmatprep.subr.mxu0 0.0
        %441 = vmatpush1.xpose.msra.mxu0 0.0
        %442 = vmatprep.subr.mxu0 0.0
        %443 = vmatpush1.xpose.msra.mxu0 0.0
        %444 = vmatprep.subr.mxu0 0.0
        %445 = vmatpush1.xpose.msra.mxu0 0.0
        %446 = vmatprep.subr.mxu0 0.0
        %447 = vmatpush1.xpose.msra.mxu0 0.0
        %448 = vmatprep.subr.mxu0 0.0
        %449 = vmatpush1.xpose.msra.mxu0 0.0
        %450 = vmatprep.subr.mxu0 0.0
        %451 = vmatpush1.xpose.msra.mxu0 0.0
        %452 = vmatprep.subr.mxu0 0.0
        %453 = vmatpush1.xpose.msra.mxu0 0.0
        %454 = vmatprep.subr.mxu0 0.0
        %455 = vmatpush1.xpose.msra.mxu0 0.0
        %456 = vmatprep.subr.mxu0 0.0
        %457 = vmatpush1.xpose.msra.mxu0 0.0
        %458 = vmatprep.subr.mxu0 0.0
        %459 = vmatpush1.xpose.msra.mxu0 0.0
        %460 = vmatprep.subr.mxu0 0.0
        %461 = vmatpush1.xpose.msra.mxu0 0.0
        %462 = vmatprep.subr.mxu0 0.0
        %463 = vmatpush1.xpose.msra.mxu0 0.0
        %464 = vmatprep.subr.mxu0 0.0
        %465 = vmatpush1.xpose.msra.mxu0 0.0
        %466 = vmatprep.subr.mxu0 0.0
        %467 = vmatpush1.xpose.msra.mxu0 0.0
        %468 = vmatprep.subr.mxu0 0.0
        %469 = vmatpush1.xpose.msra.mxu0 0.0
        %470 = vmatprep.subr.mxu0 0.0
        %471 = vmatpush1.xpose.msra.mxu0 0.0
        %472 = vmatprep.subr.mxu0 0.0
        %473 = vmatpush1.xpose.msra.mxu0 0.0
        %474 = vmatprep.mubr.f32.mxu0 0.0
        %475 = vmatmul.mubr.f32.gmra.mrb[0].mxu0 %v405
        %v476 = vpop.f32.mrb[0].mxu0
        %v477 = vadd.f32 0.0, %v476
        %v478 = vpop.f32.mrb[0].mxu0
        %479 = vdwg.mxu0
        %vm480 = vcmask 64512
        %v481 = vsel %vm480, %v477, -inf
        %482 = vmax.xlane.f32.xlu0 %v481
        %v483 = vpop.xlane.xlu0 %482
        %v484 = vsub.f32 %v477, %v483
        %v485 = vmul.f32 %v484, 1.442695
        %v486 = vpow.pop %v485
        %v487 = vsel %vm480, %v486, 0.0
        %488 = vadd.xlane.f32.xlu0 %v487
        %v489 = vpop.xlane.xlu0 %488
        %490 = vrot.lane.b32.xlu0 %v402, 96
        %v491 = vpop.permute.xlu0 %490
        %v494 = vsel %vm480, %v486, 0
        %496 = vmatprep.subr.mxu0 0.0
        %497 = vmatpush1.msra.mxu0 %v491
        %498 = vmatprep.subr.mxu0 0.0
        %499 = vmatpush1.msra.mxu0 0.0
        %500 = vmatprep.subr.mxu0 0.0
        %501 = vmatpush1.msra.mxu0 0.0
        %502 = vmatprep.subr.mxu0 0.0
        %503 = vmatpush1.msra.mxu0 0.0
        %504 = vmatprep.subr.mxu0 0.0
        %505 = vmatpush1.msra.mxu0 0.0
        %506 = vmatprep.subr.mxu0 0.0
        %507 = vmatpush1.msra.mxu0 0.0
        %508 = vmatprep.subr.mxu0 0.0
        %509 = vmatpush1.msra.mxu0 0.0
        %510 = vmatprep.subr.mxu0 0.0
        %511 = vmatpush1.msra.mxu0 0.0
        %512 = vmatprep.subr.mxu0 0.0
        %513 = vmatpush1.msra.mxu0 0.0
        %514 = vmatprep.subr.mxu0 0.0
        %515 = vmatpush1.msra.mxu0 0.0
        %516 = vmatprep.subr.mxu0 0.0
        %517 = vmatpush1.msra.mxu0 0.0
        %518 = vmatprep.subr.mxu0 0.0
        %519 = vmatpush1.msra.mxu0 0.0
        %520 = vmatprep.subr.mxu0 0.0
        %521 = vmatpush1.msra.mxu0 0.0
        %522 = vmatprep.subr.mxu0 0.0
        %523 = vmatpush1.msra.mxu0 0.0
        %524 = vmatprep.subr.mxu0 0.0
        %525 = vmatpush1.msra.mxu0 0.0
        %526 = vmatprep.subr.mxu0 0.0
        %527 = vmatpush1.msra.mxu0 0.0
        %528 = vmatprep.subr.mxu0 0.0
        %529 = vmatpush1.msra.mxu0 0.0
        %530 = vmatprep.subr.mxu0 0.0
        %531 = vmatpush1.msra.mxu0 0.0
        %532 = vmatprep.subr.mxu0 0.0
        %533 = vmatpush1.msra.mxu0 0.0
        %534 = vmatprep.subr.mxu0 0.0
        %535 = vmatpush1.msra.mxu0 0.0
        %536 = vmatprep.subr.mxu0 0.0
        %537 = vmatpush1.msra.mxu0 0.0
        %538 = vmatprep.subr.mxu0 0.0
        %539 = vmatpush1.msra.mxu0 0.0
        %540 = vmatprep.subr.mxu0 0.0
        %541 = vmatpush1.msra.mxu0 0.0
        %542 = vmatprep.subr.mxu0 0.0
        %543 = vmatpush1.msra.mxu0 0.0
        %544 = vmatprep.subr.mxu0 0.0
        %545 = vmatpush1.msra.mxu0 0.0
        %546 = vmatprep.subr.mxu0 0.0
        %547 = vmatpush1.msra.mxu0 0.0
        %548 = vmatprep.subr.mxu0 0.0
        %549 = vmatpush1.msra.mxu0 0.0
        %550 = vmatprep.subr.mxu0 0.0
        %551 = vmatpush1.msra.mxu0 0.0
        %552 = vmatprep.subr.mxu0 0.0
        %553 = vmatpush1.msra.mxu0 0.0
        %554 = vmatprep.subr.mxu0 0.0
        %555 = vmatpush1.msra.mxu0 0.0
        %556 = vmatprep.subr.mxu0 0.0
        %557 = vmatpush1.msra.mxu0 0.0
        %558 = vmatprep.subr.mxu0 0.0
        %559 = vmatpush1.msra.mxu0 0.0
        %560 = vmatprep.mubr.f32.mxu0 0.0
        %561 = vmatmul.mubr.f32.gmra.mrb[0].mxu0 %v494
        %v562 = vpop.f32.mrb[0].mxu0
        %v563 = vadd.f32 0.0, %v562
        %v564 = vpop.f32.mrb[0].mxu0
        %565 = vdwg.mxu0
        %v566 = vrcp.pop %v489
        %v567 = vmul.f32 %v563, %v566
        %568 = vrot.lane.b32.xlu0 %v401, 112
        %v569 = vpop.permute.xlu0 %568
        %570 = vrot.lane.b32.xlu0 %v402, 112
        %v571 = vpop.permute.xlu0 %570
        %v572 = vsel %vm403, %v569, 0
        %v574 = vsel %vm403, %v571, 0
        %576 = vmatprep.subr.mxu0 0.0
        %577 = vmatpush1.xpose.msra.mxu0 %v574
        %578 = vmatprep.subr.mxu0 0.0
        %579 = vmatpush1.xpose.msra.mxu0 0.0
        %580 = vmatprep.subr.mxu0 0.0
        %581 = vmatpush1.xpose.msra.mxu0 0.0
        %582 = vmatprep.subr.mxu0 0.0
        %583 = vmatpush1.xpose.msra.mxu0 0.0
        %584 = vmatprep.subr.mxu0 0.0
        %585 = vmatpush1.xpose.msra.mxu0 0.0
        %586 = vmatprep.subr.mxu0 0.0
        %587 = vmatpush1.xpose.msra.mxu0 0.0
        %588 = vmatprep.subr.mxu0 0.0
        %589 = vmatpush1.xpose.msra.mxu0 0.0
        %590 = vmatprep.subr.mxu0 0.0
        %591 = vmatpush1.xpose.msra.mxu0 0.0
        %592 = vmatprep.subr.mxu0 0.0
        %593 = vmatpush1.xpose.msra.mxu0 0.0
        %594 = vmatprep.subr.mxu0 0.0
        %595 = vmatpush1.xpose.msra.mxu0 0.0
        %596 = vmatprep.subr.mxu0 0.0
        %597 = vmatpush1.xpose.msra.mxu0 0.0
        %598 = vmatprep.subr.mxu0 0.0
        %599 = vmatpush1.xpose.msra.mxu0 0.0
        %600 = vmatprep.subr.mxu0 0.0
        %601 = vmatpush1.xpose.msra.mxu0 0.0
        %602 = vmatprep.subr.mxu0 0.0
        %603 = vmatpush1.xpose.msra.mxu0 0.0
        %604 = vmatprep.subr.mxu0 0.0
        %605 = vmatpush1.xpose.msra.mxu0 0.0
        %606 = vmatprep.subr.mxu0 0.0
        %607 = vmatpush1.xpose.msra.mxu0 0.0
        %608 = vmatprep.subr.mxu0 0.0
        %609 = vmatpush1.xpose.msra.mxu0 0.0
        %610 = vmatprep.subr.mxu0 0.0
        %611 = vmatpush1.xpose.msra.mxu0 0.0
        %612 = vmatprep.subr.mxu0 0.0
        %613 = vmatpush1.xpose.msra.mxu0 0.0
        %614 = vmatprep.subr.mxu0 0.0
        %615 = vmatpush1.xpose.msra.mxu0 0.0
        %616 = vmatprep.subr.mxu0 0.0
        %617 = vmatpush1.xpose.msra.mxu0 0.0
        %618 = vmatprep.subr.mxu0 0.0
        %619 = vmatpush1.xpose.msra.mxu0 0.0
        %620 = vmatprep.subr.mxu0 0.0
        %621 = vmatpush1.xpose.msra.mxu0 0.0
        %622 = vmatprep.subr.mxu0 0.0
        %623 = vmatpush1.xpose.msra.mxu0 0.0
        %624 = vmatprep.subr.mxu0 0.0
        %625 = vmatpush1.xpose.msra.mxu0 0.0
        %626 = vmatprep.subr.mxu0 0.0
        %627 = vmatpush1.xpose.msra.mxu0 0.0
        %628 = vmatprep.subr.mxu0 0.0
        %629 = vmatpush1.xpose.msra.mxu0 0.0
        %630 = vmatprep.subr.mxu0 0.0
        %631 = vmatpush1.xpose.msra.mxu0 0.0
        %632 = vmatprep.subr.mxu0 0.0
        %633 = vmatpush1.xpose.msra.mxu0 0.0
        %634 = vmatprep.subr.mxu0 0.0
        %635 = vmatpush1.xpose.msra.mxu0 0.0
        %636 = vmatprep.subr.mxu0 0.0
        %637 = vmatpush1.xpose.msra.mxu0 0.0
        %638 = vmatprep.subr.mxu0 0.0
        %639 = vmatpush1.xpose.msra.mxu0 0.0
        %640 = vmatprep.mubr.f32.mxu0 0.0
        %641 = vmatmul.mubr.f32.gmra.mrb[0].mxu0 %v572
        %v642 = vpop.f32.mrb[0].mxu0
        %v643 = vadd.f32 0.0, %v642
        %v644 = vpop.f32.mrb[0].mxu0
        %645 = vdwg.mxu0
        %v646 = vsel %vm480, %v643, -inf
        %647 = vmax.xlane.f32.xlu0 %v646
        %v648 = vpop.xlane.xlu0 %647
        %v649 = vsub.f32 %v643, %v648
        %v650 = vmul.f32 %v649, 1.442695
        %v651 = vpow.pop %v650
        %v652 = vsel %vm480, %v651, 0.0
        %653 = vadd.xlane.f32.xlu0 %v652
        %v654 = vpop.xlane.xlu0 %653
        %655 = vrot.lane.b32.xlu0 %v402, 80
        %v656 = vpop.permute.xlu0 %655
        %v659 = vsel %vm480, %v651, 0
        %661 = vmatprep.subr.mxu0 0.0
        %662 = vmatpush1.msra.mxu0 %v656
        %663 = vmatprep.subr.mxu0 0.0
        %664 = vmatpush1.msra.mxu0 0.0
        %665 = vmatprep.subr.mxu0 0.0
        %666 = vmatpush1.msra.mxu0 0.0
        %667 = vmatprep.subr.mxu0 0.0
        %668 = vmatpush1.msra.mxu0 0.0
        %669 = vmatprep.subr.mxu0 0.0
        %670 = vmatpush1.msra.mxu0 0.0
        %671 = vmatprep.subr.mxu0 0.0
        %672 = vmatpush1.msra.mxu0 0.0
        %673 = vmatprep.subr.mxu0 0.0
        %674 = vmatpush1.msra.mxu0 0.0
        %675 = vmatprep.subr.mxu0 0.0
        %676 = vmatpush1.msra.mxu0 0.0
        %677 = vmatprep.subr.mxu0 0.0
        %678 = vmatpush1.msra.mxu0 0.0
        %679 = vmatprep.subr.mxu0 0.0
        %680 = vmatpush1.msra.mxu0 0.0
        %681 = vmatprep.subr.mxu0 0.0
        %682 = vmatpush1.msra.mxu0 0.0
        %683 = vmatprep.subr.mxu0 0.0
        %684 = vmatpush1.msra.mxu0 0.0
        %685 = vmatprep.subr.mxu0 0.0
        %686 = vmatpush1.msra.mxu0 0.0
        %687 = vmatprep.subr.mxu0 0.0
        %688 = vmatpush1.msra.mxu0 0.0
        %689 = vmatprep.subr.mxu0 0.0
        %690 = vmatpush1.msra.mxu0 0.0
        %691 = vmatprep.subr.mxu0 0.0
        %692 = vmatpush1.msra.mxu0 0.0
        %693 = vmatprep.subr.mxu0 0.0
        %694 = vmatpush1.msra.mxu0 0.0
        %695 = vmatprep.subr.mxu0 0.0
        %696 = vmatpush1.msra.mxu0 0.0
        %697 = vmatprep.subr.mxu0 0.0
        %698 = vmatpush1.msra.mxu0 0.0
        %699 = vmatprep.subr.mxu0 0.0
        %700 = vmatpush1.msra.mxu0 0.0
        %701 = vmatprep.subr.mxu0 0.0
        %702 = vmatpush1.msra.mxu0 0.0
        %703 = vmatprep.subr.mxu0 0.0
        %704 = vmatpush1.msra.mxu0 0.0
        %705 = vmatprep.subr.mxu0 0.0
        %706 = vmatpush1.msra.mxu0 0.0
        %707 = vmatprep.subr.mxu0 0.0
        %708 = vmatpush1.msra.mxu0 0.0
        %709 = vmatprep.subr.mxu0 0.0
        %710 = vmatpush1.msra.mxu0 0.0
        %711 = vmatprep.subr.mxu0 0.0
        %712 = vmatpush1.msra.mxu0 0.0
        %713 = vmatprep.subr.mxu0 0.0
        %714 = vmatpush1.msra.mxu0 0.0
        %715 = vmatprep.subr.mxu0 0.0
        %716 = vmatpush1.msra.mxu0 0.0
        %717 = vmatprep.subr.mxu0 0.0
        %718 = vmatpush1.msra.mxu0 0.0
        %719 = vmatprep.subr.mxu0 0.0
        %720 = vmatpush1.msra.mxu0 0.0
        %721 = vmatprep.subr.mxu0 0.0
        %722 = vmatpush1.msra.mxu0 0.0
        %723 = vmatprep.subr.mxu0 0.0
        %724 = vmatpush1.msra.mxu0 0.0
        %725 = vmatprep.mubr.f32.mxu0 0.0
        %726 = vmatmul.mubr.f32.gmra.mrb[0].mxu0 %v659
        %v727 = vpop.f32.mrb[0].mxu0
        %v728 = vadd.f32 0.0, %v727
        %v729 = vpop.f32.mrb[0].mxu0
        %730 = vdwg.mxu0
        %v731 = vrcp.pop %v654
        %v732 = vmul.f32 %v728, %v731
        %734 = vrot.lane.b32.xlu0 %v732, 16
        %v735 = vpop.permute.xlu0 %734
        %v737 = vsel %vm403, %v567, %v735
        %v738 = vadd.f32 %v399, %v737
        %vm739 = vcmask 261120
        %740 = vst.msk [vmem:[%s268] sm:$0xff] %vm739, %v738
        %s741 = sand.u32 %s155, 1
        %s742 = scalar_lea.sflag [#allocation6], %s741
        %s743 = sand.u32 %s155, 1
        %s744 = smul.addr %s743, 8
        %s745 = scalar_lea.vmem [#allocation9], %s744
        // Predicated region
        $region53: #{tpu_custom_call.1} parent=39 // pred_check
          %p746 = pneg %p165
        $region54: #{tpu_custom_call.1} parent=39 // pred_check_branch
          %748 = sbr.rel (%p746) target = $region56
        $region55: #{tpu_custom_call.1} parent=39 // pred_region
          %s750 = ssub.s32 128, 128
          %751 = vsyncadd %s742, %s750
          %s752 = sadd.s32 %s28, %s27
          %s753 = smul.addr %s752, 128
          %s754 = scalar_lea.hbm %s5, %s753
          %s756 = sshll.u32 %s745, 4
          %s757 = int_to_ptr.vmem [resolvable:$true] %s756
          %759 = dma.vmem_to_hbm [thread:$0]  %s757, 128, %s754, %s742
        $region56: #{tpu_custom_call.1} parent=39 // pred_fallthru
          _
      $region40: #{tpu_custom_call.1} parent=5 // pred_fallthru
        _
      %p760 = scmp.le.s32.totalorder 2, %s18
      // Predicated region
      $region57: #{tpu_custom_call.1} parent=5 // pred_check
        %p761 = pneg %p760
      $region58: #{tpu_custom_call.1} parent=5 // pred_check_branch
        %763 = sbr.rel (%p761) target = $region60
      $region59: #{tpu_custom_call.1} parent=5 // pred_region
        %s764 = ssub.s32 %s18, 2
        // Predicated region
        $region61: #{tpu_custom_call.1} parent=59 // pred_check
          %p765 = pneg %p171
        $region62: #{tpu_custom_call.1} parent=59 // pred_check_branch
          %767 = sbr.rel (%p765) target = $region64
        $region63: #{tpu_custom_call.1} parent=59 // pred_region
          %s768 = sand.u32 %s156, 1
          %s769 = scalar_lea.sflag [#allocation6], %s768
          %s770 = sand.u32 %s156, 1
          %s771 = smul.addr %s770, 8
          %s772 = scalar_lea.vmem [#allocation9], %s771
          %773 = dma.done %s769, 128
        $region64: #{tpu_custom_call.1} parent=59 // pred_fallthru
          _
      $region60: #{tpu_custom_call.1} parent=5 // pred_fallthru
        _
    $region6: #{tpu_custom_call.1} parent=1 // loop_footer
      %s22 = sadd.s32 1, %s18
    $region7: #{tpu_custom_call.1} parent=1 // loop_footer_branch
      %17 = sbr.rel target = $region3
    $region8: #{tpu_custom_call.1} parent=1 // loop_exit
      _
    %774 = vsyncpa [#allocation5], 1
    %s775 = scalar_lea.sflag [#allocation5], 1
    %776 = vsyncpa %s775, 1
    %777 = vsyncpa [#allocation8], 1
    %778 = vsyncpa [#allocation6], 1
    %s779 = scalar_lea.sflag [#allocation6], 1
    %780 = vsyncpa %s779, 1

</llo_original>
